<compile_context>
chip_gen: v7x
topology: tpu7x:2x2x1
jax: 0.10.0
libtpu: 0.0.40
codegen_flags: <defaults>
</compile_context>

<pallas_src>
import math
import jax
import jax.numpy as jnp
from jax.experimental import pallas as pl
from jax.experimental.pallas import tpu as pltpu


# ----------------------------- Pallas kernel --------------------------------
def _patch_embed_kernel(p_ref, w_ref, b_ref, g_ref, beta_ref, o_ref):
    # p_ref: [Din, TM] (bf16/f32)  w_ref: [E, Din] (bf16/f32)
    # b_ref/g_ref/beta_ref: [E, 1] f32             o_ref: [E, TM]
    acc = jnp.dot(w_ref[...], p_ref[...], preferred_element_type=jnp.float32)  # (E, TM) f32
    acc = acc + b_ref[...]                                   # conv bias (lane broadcast)

    # channels_first LayerNorm over the embed axis (axis 0), biased variance, eps=1e-6.
    mean = jnp.mean(acc, axis=0, keepdims=True)              # (1, TM)
    cen = acc - mean
    var = jnp.mean(cen * cen, axis=0, keepdims=True)         # (1, TM)
    inv = jax.lax.rsqrt(var + 1e-6)                          # EUP rsqrt (frees VPU slots)
    y = cen * inv * g_ref[...] + beta_ref[...]
    o_ref[...] = y.astype(o_ref.dtype)


def _run_patch_embed(patches, w_mat, bias, gamma, beta, out_dtype, tm_target):
    """patches: [B, Din, T], w_mat: [E, Din], bias/gamma/beta: [E, 1] -> [B, E, T]."""
    b, din, t = patches.shape
    e = w_mat.shape[0]

    # Token tile: multiple of 128 lanes (dense stores) unless the whole row fits.
    if t <= tm_target:
        tm = t
    else:
        tm = max(128, (tm_target // 128) * 128)
    n_t = pl.cdiv(t, tm)

    return pl.pallas_call(
        _patch_embed_kernel,
        out_shape=jax.ShapeDtypeStruct((b, e, t), out_dtype),
        grid=(b, n_t),
        in_specs=[
            # patches: tiled along the token (lane) axis, batch dim squeezed.
            pl.BlockSpec((None, din, tm), lambda bi, ti: (bi, 0, ti)),
            # weights / bias / gamma / beta: constant index map -> VMEM resident.
            pl.BlockSpec((e, din), lambda bi, ti: (0, 0)),
            pl.BlockSpec((e, 1), lambda bi, ti: (0, 0)),
            pl.BlockSpec((e, 1), lambda bi, ti: (0, 0)),
            pl.BlockSpec((e, 1), lambda bi, ti: (0, 0)),
        ],
        out_specs=pl.BlockSpec((None, e, tm), lambda bi, ti: (bi, 0, ti)),
        compiler_params=pltpu.CompilerParams(
            dimension_semantics=("parallel", "parallel")),   # megacore-friendly on v7x
    )(patches, w_mat, bias, gamma, beta)


# ------------------------------- JAX glue ------------------------------------
def overlap_patch_embed(x_nchw, conv_w, conv_b, ln_gamma, ln_beta,
                        patch_size=7, stride=4,
                        compute_dtype=jnp.bfloat16, out_dtype=None, tm_target=1024):
    """Forward of OverlapPatchEmbed. x_nchw: [B, Cin, H, W]; conv_w: [E, Cin, K, K] (OIHW).
    Returns (y [B, E, Ho, Wo] channels-first, Ho, Wo)."""
    b, cin, h, w = x_nchw.shape
    e = conv_w.shape[0]
    k = patch_size
    pad = k // 2
    if out_dtype is None:
        out_dtype = x_nchw.dtype

    ho = (h + 2 * pad - k) // stride + 1
    wo = (w + 2 * pad - k) // stride + 1
    t = ho * wo
    din = cin * k * k

    # im2col via XLA's patch extractor (static strided windows, no gathers).
    # Output: (B, Cin*K*K, Ho, Wo) with feature order (c, kh, kw).
    patches = jax.lax.conv_general_dilated_patches(
        x_nchw.astype(compute_dtype),
        filter_shape=(k, k),
        window_strides=(stride, stride),
        padding=((pad, pad), (pad, pad)),
        dimension_numbers=("NCHW", "OIHW", "NCHW"))
    assert patches.shape == (b, din, ho, wo), patches.shape
    patches = patches.reshape(b, din, t)

    # OIHW (E, Cin, K, K) -> (E, Din): a plain reshape gives the same (c, kh, kw) order.
    w_mat = conv_w.reshape(e, din).astype(compute_dtype)

    y = _run_patch_embed(
        patches, w_mat,
        conv_b.reshape(e, 1).astype(jnp.float32),
        ln_gamma.reshape(e, 1).astype(jnp.float32),
        ln_beta.reshape(e, 1).astype(jnp.float32),
        out_dtype=out_dtype, tm_target=tm_target)

    # (B, E, Ho*Wo) -> (B, E, Ho, Wo): pure reshape, no transpose pass.
    return y.reshape(b, e, ho, wo), ho, wo


# ------------------------------ reference ------------------------------------
def _reference(x_nchw, conv_w, conv_b, gamma, beta, stride=4, pad=3, eps=1e-6):
    y = jax.lax.conv_general_dilated(
        x_nchw, conv_w, window_strides=(stride, stride),
        padding=((pad, pad), (pad, pad)),
        dimension_numbers=("NCHW", "OIHW", "NCHW"))
    y = y + conv_b[None, :, None, None]
    u = jnp.mean(y, axis=1, keepdims=True)
    s = jnp.mean((y - u) ** 2, axis=1, keepdims=True)
    y = (y - u) / jnp.sqrt(s + eps)
    return gamma[None, :, None, None] * y + beta[None, :, None, None]


# --------------------------------- main ---------------------------------------
if __name__ == "__main__":
    B, Cin, H, W = 2, 4, 16, 16
    E, K, STRIDE = 32, 7, 4

    key = jax.random.PRNGKey(0)
    kx, kw, kx2 = jax.random.split(key, 3)

    x = jax.random.normal(kx, (B, Cin, H, W), dtype=jnp.float32)

    # Deterministic init matching the module's _init_weights:
    # Conv2d: weight ~ N(0, sqrt(2 / (K*K*E))), bias = 0; LayerNorm: weight=1, bias=0.
    fan_out = K * K * E
    conv_w = jax.random.normal(kw, (E, Cin, K, K), dtype=jnp.float32) * math.sqrt(2.0 / fan_out)
    conv_b = jnp.zeros((E,), dtype=jnp.float32)
    ln_gamma = jnp.ones((E,), dtype=jnp.float32)
    ln_beta = jnp.zeros((E,), dtype=jnp.float32)

    # --- f32 compute path: tight check against the XLA conv reference ----------
    y32, Ho, Wo = overlap_patch_embed(x, conv_w, conv_b, ln_gamma, ln_beta,
                                      patch_size=K, stride=STRIDE,
                                      compute_dtype=jnp.float32)
    y32 = jax.block_until_ready(y32)
    ref = _reference(x, conv_w, conv_b, ln_gamma, ln_beta, stride=STRIDE, pad=K // 2)
    assert y32.shape == (B, E, Ho, Wo), y32.shape
    assert jnp.allclose(y32, ref, atol=2e-3, rtol=2e-3), float(jnp.max(jnp.abs(y32 - ref)))

    # --- bf16 compute path (production default): compare against the reference
    #     evaluated on bf16-rounded inputs (only f32 summation order differs). ---
    ybf, Ho, Wo = overlap_patch_embed(x, conv_w, conv_b, ln_gamma, ln_beta,
                                      patch_size=K, stride=STRIDE)  # bf16 operands
    ybf = jax.block_until_ready(ybf)
    x_r = x.astype(jnp.bfloat16).astype(jnp.float32)
    w_r = conv_w.astype(jnp.bfloat16).astype(jnp.float32)
    ref_bf = _reference(x_r, w_r, conv_b, ln_gamma, ln_beta, stride=STRIDE, pad=K // 2)
    assert jnp.allclose(ybf, ref_bf, atol=2e-3, rtol=2e-3), float(jnp.max(jnp.abs(ybf - ref_bf)))

    # --- medium shape: exercises multi-tile token grid incl. a partial last tile.
    x2 = jax.random.normal(kx2, (B, Cin, 60, 60), dtype=jnp.float32)
    y2, Ho2, Wo2 = overlap_patch_embed(x2, conv_w, conv_b, ln_gamma, ln_beta,
                                       patch_size=K, stride=STRIDE, tm_target=128)
    y2 = jax.block_until_ready(y2)
    x2_r = x2.astype(jnp.bfloat16).astype(jnp.float32)
    ref2 = _reference(x2_r, w_r, conv_b, ln_gamma, ln_beta, stride=STRIDE, pad=K // 2)
    assert y2.shape == (B, E, Ho2, Wo2), y2.shape
    assert jnp.allclose(y2, ref2, atol=2e-3, rtol=2e-3), float(jnp.max(jnp.abs(y2 - ref2)))

    print("KERNEL_OK")
</pallas_src>

<mosaic_0001>
module attributes {stable_mosaic.version = 11 : i64} {
  func.func @_patch_embed_kernel(%arg0: i32, %arg1: i32, %arg2: memref<1x196x16xf32, #tpu.memory_space<vmem>>, %arg3: memref<32x196xf32, #tpu.memory_space<vmem>>, %arg4: memref<32x1xf32, #tpu.memory_space<vmem>>, %arg5: memref<32x1xf32, #tpu.memory_space<vmem>>, %arg6: memref<32x1xf32, #tpu.memory_space<vmem>>, %arg7: memref<1x32x16xf32, #tpu.memory_space<vmem>>) attributes {dimension_semantics = [#tpu.dimension_semantics<parallel>, #tpu.dimension_semantics<parallel>], iteration_bounds = array<i64: 2, 1>, scalar_prefetch = 0 : i64, scratch_operands = 0 : i64, tpu.core_type = #tpu.core_type<tc>, window_params = [{transform_indices = @transform_0, window_bounds = array<i64: 1, 196, 16>}, {pipeline_mode = #tpu.pipeline_mode<synchronous>, transform_indices = @transform_1, window_bounds = array<i64: 32, 196>}, {pipeline_mode = #tpu.pipeline_mode<synchronous>, transform_indices = @transform_2, window_bounds = array<i64: 32, 1>}, {pipeline_mode = #tpu.pipeline_mode<synchronous>, transform_indices = @transform_3, window_bounds = array<i64: 32, 1>}, {pipeline_mode = #tpu.pipeline_mode<synchronous>, transform_indices = @transform_4, window_bounds = array<i64: 32, 1>}, {transform_indices = @transform_5, window_bounds = array<i64: 1, 32, 16>}]} {
    %c0 = arith.constant 0 : index
    %c0_0 = arith.constant 0 : index
    %0 = vector.load %arg3[%c0, %c0_0] : memref<32x196xf32, #tpu.memory_space<vmem>>, vector<32x196xf32>
    %c0_1 = arith.constant 0 : index
    %c0_2 = arith.constant 0 : index
    %c0_3 = arith.constant 0 : index
    %1 = vector.load %arg2[%c0_1, %c0_2, %c0_3] : memref<1x196x16xf32, #tpu.memory_space<vmem>>, vector<1x196x16xf32>
    %2 = vector.shape_cast %1 : vector<1x196x16xf32> to vector<196x16xf32>
    %cst = arith.constant dense<0.000000e+00> : vector<32x16xf32>
    %3 = tpu.matmul %0, %2, %cst {dimension_numbers = #tpu.dot_dimension_numbers<[1], [0], [0], [1], [0, 0, 1, 1], [], []>} : vector<32x196xf32>, vector<196x16xf32>, vector<32x16xf32> -> vector<32x16xf32>
    %c0_4 = arith.constant 0 : index
    %c0_5 = arith.constant 0 : index
    %4 = vector.load %arg4[%c0_4, %c0_5] : memref<32x1xf32, #tpu.memory_space<vmem>>, vector<32x1xf32>
    %5 = vector.broadcast %4 : vector<32x1xf32> to vector<32x16xf32>
    %6 = arith.addf %3, %5 : vector<32x16xf32>
    %cst_6 = arith.constant dense<0.000000e+00> : vector<16xf32>
    %7 = vector.multi_reduction <add>, %6, %cst_6 [0] : vector<32x16xf32> to vector<16xf32>
    %8 = vector.shape_cast %7 : vector<16xf32> to vector<1x16xf32>
    %cst_7 = arith.constant 3.200000e+01 : f32
    %9 = vector.broadcast %cst_7 : f32 to vector<1x16xf32>
    %10 = arith.divf %8, %9 : vector<1x16xf32>
    %11 = vector.broadcast %10 : vector<1x16xf32> to vector<32x16xf32>
    %12 = arith.subf %6, %11 : vector<32x16xf32>
    %13 = arith.mulf %12, %12 : vector<32x16xf32>
    %cst_8 = arith.constant dense<0.000000e+00> : vector<16xf32>
    %14 = vector.multi_reduction <add>, %13, %cst_8 [0] : vector<32x16xf32> to vector<16xf32>
    %15 = vector.shape_cast %14 : vector<16xf32> to vector<1x16xf32>
    %cst_9 = arith.constant 3.200000e+01 : f32
    %16 = vector.broadcast %cst_9 : f32 to vector<1x16xf32>
    %17 = arith.divf %15, %16 : vector<1x16xf32>
    %cst_10 = arith.constant 9.99999997E-7 : f32
    %18 = vector.broadcast %cst_10 : f32 to vector<1x16xf32>
    %19 = arith.addf %17, %18 : vector<1x16xf32>
    %20 = math.rsqrt %19 : vector<1x16xf32>
    %21 = vector.broadcast %20 : vector<1x16xf32> to vector<32x16xf32>
    %22 = arith.mulf %12, %21 : vector<32x16xf32>
    %c0_11 = arith.constant 0 : index
    %c0_12 = arith.constant 0 : index
    %23 = vector.load %arg5[%c0_11, %c0_12] : memref<32x1xf32, #tpu.memory_space<vmem>>, vector<32x1xf32>
    %24 = vector.broadcast %23 : vector<32x1xf32> to vector<32x16xf32>
    %25 = arith.mulf %22, %24 : vector<32x16xf32>
    %c0_13 = arith.constant 0 : index
    %c0_14 = arith.constant 0 : index
    %26 = vector.load %arg6[%c0_13, %c0_14] : memref<32x1xf32, #tpu.memory_space<vmem>>, vector<32x1xf32>
    %27 = vector.broadcast %26 : vector<32x1xf32> to vector<32x16xf32>
    %28 = arith.addf %25, %27 : vector<32x16xf32>
    %c0_15 = arith.constant 0 : index
    %c0_16 = arith.constant 0 : index
    %c0_17 = arith.constant 0 : index
    %29 = vector.load %arg7[%c0_15, %c0_16, %c0_17] : memref<1x32x16xf32, #tpu.memory_space<vmem>>, vector<1x32x16xf32>
    %30 = vector.shape_cast %29 : vector<1x32x16xf32> to vector<32x16xf32>
    %31 = vector.shape_cast %28 : vector<32x16xf32> to vector<1x32x16xf32>
    tpu.vector_store %arg7[%c0_15, %c0_16, %c0_17], %31 {strides = array<i32>} : memref<1x32x16xf32, #tpu.memory_space<vmem>>, vector<1x32x16xf32>,
    return
  }
  func.func @transform_0(%arg0: i32, %arg1: i32) -> (i32, i32, i32) {
    %c0_i32 = arith.constant 0 : i32
    %c0_i32_0 = arith.constant 0 : i32
    return %arg0, %c0_i32, %arg1 : i32, i32, i32
  }
  func.func @transform_1(%arg0: i32, %arg1: i32) -> (i32, i32) {
    %c0_i32 = arith.constant 0 : i32
    %c0_i32_0 = arith.constant 0 : i32
    %c0_i32_1 = arith.constant 0 : i32
    return %c0_i32, %c0_i32_0 : i32, i32
  }
  func.func @transform_2(%arg0: i32, %arg1: i32) -> (i32, i32) {
    %c0_i32 = arith.constant 0 : i32
    %c0_i32_0 = arith.constant 0 : i32
    %c0_i32_1 = arith.constant 0 : i32
    return %c0_i32, %c0_i32_0 : i32, i32
  }
  func.func @transform_3(%arg0: i32, %arg1: i32) -> (i32, i32) {
    %c0_i32 = arith.constant 0 : i32
    %c0_i32_0 = arith.constant 0 : i32
    %c0_i32_1 = arith.constant 0 : i32
    return %c0_i32, %c0_i32_0 : i32, i32
  }
  func.func @transform_4(%arg0: i32, %arg1: i32) -> (i32, i32) {
    %c0_i32 = arith.constant 0 : i32
    %c0_i32_0 = arith.constant 0 : i32
    %c0_i32_1 = arith.constant 0 : i32
    return %c0_i32, %c0_i32_0 : i32, i32
  }
  func.func @transform_5(%arg0: i32, %arg1: i32) -> (i32, i32, i32) {
    %c0_i32 = arith.constant 0 : i32
    %c0_i32_0 = arith.constant 0 : i32
    return %arg0, %c0_i32, %arg1 : i32, i32, i32
  }
}

</mosaic_0001>

<llo_original>
// kernel: tpu_custom_call.1
$region0: #{tpu_custom_call.1}
  #allocation0 [shape = 'u32[]', space=smem, size = 0x4, offset = 0x4, fixed_abs, tag = 'smem constant byte address 0x4 - core index']
  #allocation1 [shape = 'u32[144,128]{1,0:T(1,128)}', space=vmem, size = 0x12000, scoped, tag = 'internal scratch']
  %s0 = inlined_call_operand.vmem [shape: f32[2,196,16], index: 0, kind: input, shape index: {}]
  %s1 = inlined_call_operand.vmem [shape: f32[32,196], index: 1, kind: input, shape index: {}]
  %s2 = inlined_call_operand.vmem [shape: f32[32,1], index: 2, kind: input, shape index: {}]
  %s3 = inlined_call_operand.vmem [shape: f32[32,1], index: 3, kind: input, shape index: {}]
  %s4 = inlined_call_operand.vmem [shape: f32[32,1], index: 4, kind: input, shape index: {}]
  %s5 = inlined_call_operand.vmem [shape: f32[2,32,16], index: 5, kind: output, shape index: {}]
  %s6 = sld [smem:[#allocation0]]
  $region53: #{tpu_custom_call.1} parent=0
    _
  %s8 = ssub.s32 1, %s6
  %s9 = scalar_select 0, %s8, %s6
  loop: start=0, step=1, limit=4
  $region2: #{tpu_custom_call.1} parent=0 // loop_pre_header
    _
  $region3: #{tpu_custom_call.1} parent=0 // loop_header
    %s11 = sphi 0, %s15
    %p12 = scmp.ge.s32.totalorder %s11, 4
    %s18 = sphi 0, %s30
    %s19 = sphi 0, %s26
    %s20 = sphi 0, %s18
    %s21 = sphi 0, %s19
    %s22 = sphi 0, %s20
    %s23 = sphi 0, %s21
    %s35 = sphi 0, %s37
    %s38 = sphi 0, %s35
    %s39 = sphi 0, %s38
    %s55 = sphi 0, %s39
    %s59 = sphi 0, %s59
    %s61 = sphi 0, %s59
    %s62 = sphi 0, %s61
    %s76 = sphi 0, %s62
    %s80 = sphi 0, %s80
    %s82 = sphi 0, %s80
    %s83 = sphi 0, %s82
    %s97 = sphi 0, %s83
    %s101 = sphi 0, %s101
    %s103 = sphi 0, %s101
    %s104 = sphi 0, %s103
    %s118 = sphi 0, %s104
    %s122 = sphi 0, %s122
    %s124 = sphi 0, %s122
    %s125 = sphi 0, %s124
    %s139 = sphi 0, %s125
    %s147 = sphi 0, %s149
    %s150 = sphi 0, %s147
    %s151 = sphi 0, %s150
    %s167 = sphi 0, %s151
  $region4: #{tpu_custom_call.1} parent=0 // loop_header_branch
    %14 = sbr.rel (%p12) target = $region8
  $region5: #{tpu_custom_call.1} parent=0 // loop_body
    %s16 = ssub.s32 %s11, 1
    %s17 = ssub.s32 %s11, 2
    %s24 = sadd.s32 1, %s19
    %p25 = scmp.ge.s32.totalorder %s24, 1
    %s26 = scalar_select %p25, 0, %s24
    %s27 = sadd.s32 1, %s18
    %s28 = scalar_select %p25, %s27, %s18
    %p29 = scmp.ge.s32.totalorder %s28, 2
    %s30 = scalar_select %p29, 0, %s28
    %s31 = ssub.s32 %s18, %s30
    %s32 = ssub.s32 %s19, %s26
    %s33 = sor.u32 %s31, %s32
    %p34 = scmp.eq.s32.totalorder %s33, 0
    %s36 = sadd.s32 %s35, 1
    %s37 = scalar_select %p34, %s35, %s36
    %p40 = pneg %p34
    %p41 = scmp.eq.s32.totalorder %s11, 1
    %p42 = por %p40, %p41
    %p43 = scmp.ne.s32.totalorder %s35, %s38
    %p44 = scmp.eq.s32.totalorder %s11, 0
    %p45 = por %p43, %p44
    %p46 = scmp.ne.s32.totalorder %s35, %s38
    %p47 = scmp.eq.s32.totalorder %s16, 1
    %p48 = por %p46, %p47
    %p49 = scmp.ne.s32.totalorder %s38, %s39
    %p50 = scmp.eq.s32.totalorder %s16, 0
    %p51 = por %p49, %p50
    %p52 = scmp.ne.s32.totalorder %s38, %s39
    %p53 = scmp.eq.s32.totalorder %s17, 1
    %p54 = por %p52, %p53
    %p56 = scmp.ne.s32.totalorder %s39, %s55
    %p57 = scmp.eq.s32.totalorder %s17, 0
    %p58 = por %p56, %p57
    %s60 = sadd.s32 %s59, 1
    %p63 = scmp.eq.s32.totalorder %s11, 1
    %p64 = scmp.ne.s32.totalorder %s59, %s61
    %p65 = scmp.eq.s32.totalorder %s11, 0
    %p66 = por %p64, %p65
    %p67 = scmp.ne.s32.totalorder %s59, %s61
    %p68 = scmp.eq.s32.totalorder %s16, 1
    %p69 = por %p67, %p68
    %p70 = scmp.ne.s32.totalorder %s61, %s62
    %p71 = scmp.eq.s32.totalorder %s16, 0
    %p72 = por %p70, %p71
    %p73 = scmp.ne.s32.totalorder %s61, %s62
    %p74 = scmp.eq.s32.totalorder %s17, 1
    %p75 = por %p73, %p74
    %p77 = scmp.ne.s32.totalorder %s62, %s76
    %p78 = scmp.eq.s32.totalorder %s17, 0
    %p79 = por %p77, %p78
    %s81 = sadd.s32 %s80, 1
    %p84 = scmp.eq.s32.totalorder %s11, 1
    %p85 = scmp.ne.s32.totalorder %s80, %s82
    %p86 = scmp.eq.s32.totalorder %s11, 0
    %p87 = por %p85, %p86
    %p88 = scmp.ne.s32.totalorder %s80, %s82
    %p89 = scmp.eq.s32.totalorder %s16, 1
    %p90 = por %p88, %p89
    %p91 = scmp.ne.s32.totalorder %s82, %s83
    %p92 = scmp.eq.s32.totalorder %s16, 0
    %p93 = por %p91, %p92
    %p94 = scmp.ne.s32.totalorder %s82, %s83
    %p95 = scmp.eq.s32.totalorder %s17, 1
    %p96 = por %p94, %p95
    %p98 = scmp.ne.s32.totalorder %s83, %s97
    %p99 = scmp.eq.s32.totalorder %s17, 0
    %p100 = por %p98, %p99
    %s102 = sadd.s32 %s101, 1
    %p105 = scmp.eq.s32.totalorder %s11, 1
    %p106 = scmp.ne.s32.totalorder %s101, %s103
    %p107 = scmp.eq.s32.totalorder %s11, 0
    %p108 = por %p106, %p107
    %p109 = scmp.ne.s32.totalorder %s101, %s103
    %p110 = scmp.eq.s32.totalorder %s16, 1
    %p111 = por %p109, %p110
    %p112 = scmp.ne.s32.totalorder %s103, %s104
    %p113 = scmp.eq.s32.totalorder %s16, 0
    %p114 = por %p112, %p113
    %p115 = scmp.ne.s32.totalorder %s103, %s104
    %p116 = scmp.eq.s32.totalorder %s17, 1
    %p117 = por %p115, %p116
    %p119 = scmp.ne.s32.totalorder %s104, %s118
    %p120 = scmp.eq.s32.totalorder %s17, 0
    %p121 = por %p119, %p120
    %s123 = sadd.s32 %s122, 1
    %p126 = scmp.eq.s32.totalorder %s11, 1
    %p127 = scmp.ne.s32.totalorder %s122, %s124
    %p128 = scmp.eq.s32.totalorder %s11, 0
    %p129 = por %p127, %p128
    %p130 = scmp.ne.s32.totalorder %s122, %s124
    %p131 = scmp.eq.s32.totalorder %s16, 1
    %p132 = por %p130, %p131
    %p133 = scmp.ne.s32.totalorder %s124, %s125
    %p134 = scmp.eq.s32.totalorder %s16, 0
    %p135 = por %p133, %p134
    %p136 = scmp.ne.s32.totalorder %s124, %s125
    %p137 = scmp.eq.s32.totalorder %s17, 1
    %p138 = por %p136, %p137
    %p140 = scmp.ne.s32.totalorder %s125, %s139
    %p141 = scmp.eq.s32.totalorder %s17, 0
    %p142 = por %p140, %p141
    %s143 = ssub.s32 %s18, %s30
    %s144 = ssub.s32 %s19, %s26
    %s145 = sor.u32 %s143, %s144
    %p146 = scmp.eq.s32.totalorder %s145, 0
    %s148 = sadd.s32 %s147, 1
    %s149 = scalar_select %p146, %s147, %s148
    %p152 = pneg %p146
    %p153 = scmp.eq.s32.totalorder %s11, 1
    %p154 = por %p152, %p153
    %p155 = scmp.ne.s32.totalorder %s147, %s150
    %p156 = scmp.eq.s32.totalorder %s11, 0
    %p157 = por %p155, %p156
    %p158 = scmp.ne.s32.totalorder %s147, %s150
    %p159 = scmp.eq.s32.totalorder %s16, 1
    %p160 = por %p158, %p159
    %p161 = scmp.ne.s32.totalorder %s150, %s151
    %p162 = scmp.eq.s32.totalorder %s16, 0
    %p163 = por %p161, %p162
    %p164 = scmp.ne.s32.totalorder %s150, %s151
    %p165 = scmp.eq.s32.totalorder %s17, 1
    %p166 = por %p164, %p165
    %p168 = scmp.ne.s32.totalorder %s151, %s167
    %p169 = scmp.eq.s32.totalorder %s17, 0
    %p170 = por %p168, %p169
    %p171 = scmp.le.s32.totalorder 1, %s11
    %p172 = scmp.lt.s32.totalorder %s11, 3
    %p173 = pnand %p171, %p172
    %p174 = pneg %p173
    // Predicated region
    $region9: #{tpu_custom_call.1} parent=5 // pred_check
      _
    $region10: #{tpu_custom_call.1} parent=5 // pred_check_branch
      %176 = sbr.rel (%p173) target = $region12
    $region11: #{tpu_custom_call.1} parent=5 // pred_region
      %s177 = ssub.s32 %s11, 1
      // Predicated region
      $region13: #{tpu_custom_call.1} parent=11 // pred_check
        %p178 = pneg %p72
      $region14: #{tpu_custom_call.1} parent=11 // pred_check_branch
        %180 = sbr.rel (%p178) target = $region16
      $region15: #{tpu_custom_call.1} parent=11 // pred_region
        _
      $region16: #{tpu_custom_call.1} parent=11 // pred_fallthru
        _
      // Predicated region
      $region17: #{tpu_custom_call.1} parent=11 // pred_check
        %p181 = pneg %p93
      $region18: #{tpu_custom_call.1} parent=11 // pred_check_branch
        %183 = sbr.rel (%p181) target = $region20
      $region19: #{tpu_custom_call.1} parent=11 // pred_region
        _
      $region20: #{tpu_custom_call.1} parent=11 // pred_fallthru
        _
      // Predicated region
      $region21: #{tpu_custom_call.1} parent=11 // pred_check
        %p184 = pneg %p114
      $region22: #{tpu_custom_call.1} parent=11 // pred_check_branch
        %186 = sbr.rel (%p184) target = $region24
      $region23: #{tpu_custom_call.1} parent=11 // pred_region
        _
      $region24: #{tpu_custom_call.1} parent=11 // pred_fallthru
        _
      // Predicated region
      $region25: #{tpu_custom_call.1} parent=11 // pred_check
        %p187 = pneg %p135
      $region26: #{tpu_custom_call.1} parent=11 // pred_check_branch
        %189 = sbr.rel (%p187) target = $region28
      $region27: #{tpu_custom_call.1} parent=11 // pred_region
        _
      $region28: #{tpu_custom_call.1} parent=11 // pred_fallthru
        _
    $region12: #{tpu_custom_call.1} parent=5 // pred_fallthru
      _
    %p190 = scmp.lt.s32.totalorder %s11, 2
    // Predicated region
    $region29: #{tpu_custom_call.1} parent=5 // pred_check
      %p191 = pneg %p190
    $region30: #{tpu_custom_call.1} parent=5 // pred_check_branch
      %193 = sbr.rel (%p191) target = $region32
    $region31: #{tpu_custom_call.1} parent=5 // pred_region
      // Predicated region
      $region33: #{tpu_custom_call.1} parent=31 // pred_check
        %p194 = pneg %p45
      $region34: #{tpu_custom_call.1} parent=31 // pred_check_branch
        %196 = sbr.rel (%p194) target = $region36
      $region35: #{tpu_custom_call.1} parent=31 // pred_region
        %p197 = scmp.lt.s32.totalorder %s18, 1
        %s198 = scalar_select %p197, %s18, 1
        %p199 = scmp.lt.s32.totalorder %s19, 0
        %s200 = scalar_select %p199, %s19, 0
        %s201 = smul.addr %s198, 25
        %s202 = sadd.s32 %s200, %s201
        %s203 = smul.addr %s202, 8
        %s204 = scalar_lea.vmem %s0, %s203
      $region36: #{tpu_custom_call.1} parent=31 // pred_fallthru
        _
    $region32: #{tpu_custom_call.1} parent=5 // pred_fallthru
      _
    %p205 = scmp.le.s32.totalorder 1, %s11
    %p206 = scmp.lt.s32.totalorder %s11, 3
    %p207 = pnand %p205, %p206
    %p208 = pneg %p207
    // Predicated region
    $region37: #{tpu_custom_call.1} parent=5 // pred_check
      _
    $region38: #{tpu_custom_call.1} parent=5 // pred_check_branch
      %210 = sbr.rel (%p207) target = $region40
    $region39: #{tpu_custom_call.1} parent=5 // pred_region
      %s211 = ssub.s32 %s11, 1
      %p212 = scmp.lt.s32.totalorder %s20, 1
      %s213 = scalar_select %p212, %s20, 1
      %p214 = scmp.lt.s32.totalorder %s21, 0
      %s215 = scalar_select %p214, %s21, 0
      %s216 = smul.addr %s213, 25
      %s217 = sadd.s32 %s215, %s216
      %s218 = smul.addr %s217, 8
      %s219 = scalar_lea.vmem %s0, %s218
      %p220 = pneg %p51
      %p221 = pneg %p48
      %p222 = pneg %p72
      %p223 = pneg %p69
      %p224 = pneg %p93
      %p225 = pneg %p90
      %p226 = pneg %p114
      %p227 = pneg %p111
      %p228 = pneg %p135
      %p229 = pneg %p132
      %p230 = pneg %p163
      %p231 = pneg %p160
      %p232 = scmp.lt.s32.totalorder %s20, 1
      %s233 = scalar_select %p232, %s20, 1
      %p234 = scmp.lt.s32.totalorder %s21, 0
      %s235 = scalar_select %p234, %s21, 0
      %s236 = smul.addr %s233, 4
      %s237 = sadd.s32 %s235, %s236
      %s238 = smul.addr %s237, 8
      %s239 = scalar_lea.vmem %s5, %s238
      %p240 = scmp.lt.s32.totalorder %s20, 1
      %s241 = scalar_select %p240, %s20, 1
      %p242 = scmp.lt.s32.totalorder %s21, 0
      %s243 = scalar_select %p242, %s21, 0
      %s244 = smul.addr %s241, 25
      %s245 = sadd.s32 %s243, %s244
      %s246 = smul.addr %s245, 8
      %s247 = scalar_lea.vmem %s0, %s246
      %p248 = scmp.lt.s32.totalorder %s20, 1
      %s249 = scalar_select %p248, %s20, 1
      %p250 = scmp.lt.s32.totalorder %s21, 0
      %s251 = scalar_select %p250, %s21, 0
      %s252 = smul.addr %s249, 4
      %s253 = sadd.s32 %s251, %s252
      %s254 = smul.addr %s253, 8
      %s255 = scalar_lea.vmem %s5, %s254
      %v256 = vld [vmem:[%s1] sm:$0xff]
      %v257 = vld [vmem:[%s1 + $0x8] sm:$0xff]
      %v258 = vld [vmem:[%s1 + $0x10] sm:$0xff]
      %v259 = vld [vmem:[%s1 + $0x18] sm:$0xff]
      %v260 = vld [vmem:[%s1 + $0x20] sm:$0xff]
      %v261 = vld [vmem:[%s1 + $0x28] sm:$0xff]
      %v262 = vld [vmem:[%s1 + $0x30] sm:$0xff]
      %v263 = vld [vmem:[%s1 + $0x38] sm:$0xff]
      %v264 = vld [vmem:[%s247] sm:$0xff]
      %v265 = vld [vmem:[%s247 + $0x8] sm:$0xff]
      %v266 = vld [vmem:[%s247 + $0x10] sm:$0xff]
      %v267 = vld [vmem:[%s247 + $0x18] sm:$0xff]
      %v268 = vld [vmem:[%s247 + $0x20] sm:$0xff]
      %v269 = vld [vmem:[%s247 + $0x28] sm:$0xff]
      %v270 = vld [vmem:[%s247 + $0x30] sm:$0xff]
      %v271 = vld [vmem:[%s247 + $0x38] sm:$0xff]
      %v272 = vld [vmem:[%s247 + $0x40] sm:$0xff]
      %v273 = vld [vmem:[%s247 + $0x48] sm:$0xff]
      %v274 = vld [vmem:[%s247 + $0x50] sm:$0xff]
      %v275 = vld [vmem:[%s247 + $0x58] sm:$0xff]
      %v276 = vld [vmem:[%s247 + $0x60] sm:$0xff]
      %v277 = vld [vmem:[%s247 + $0x68] sm:$0xff]
      %v278 = vld [vmem:[%s247 + $0x70] sm:$0xff]
      %v279 = vld [vmem:[%s247 + $0x78] sm:$0xff]
      %v280 = vld [vmem:[%s247 + $0x80] sm:$0xff]
      %v281 = vld [vmem:[%s247 + $0x88] sm:$0xff]
      %v282 = vld [vmem:[%s247 + $0x90] sm:$0xff]
      %v283 = vld [vmem:[%s247 + $0x98] sm:$0xff]
      %v284 = vld [vmem:[%s247 + $0xa0] sm:$0xff]
      %v285 = vld [vmem:[%s247 + $0xa8] sm:$0xff]
      %v286 = vld [vmem:[%s247 + $0xb0] sm:$0xff]
      %v287 = vld [vmem:[%s247 + $0xb8] sm:$0xff]
      %v288 = vld [vmem:[%s247 + $0xc0] sm:$0xf]
      %v289 = vld [vmem:[%s2] sm:$0xff]
      %v290 = vld [vmem:[%s2 + $0x8] sm:$0xff]
      %v291 = vld [vmem:[%s2 + $0x10] sm:$0xff]
      %v292 = vld [vmem:[%s2 + $0x18] sm:$0xff]
      %294 = vset.pattern.permute.xlu0 0
      %295 = vperm.xlu0 %294, %v289
      %v296 = vpop.permute.xlu0 %295
      %299 = vset.pattern.permute.xlu0 0
      %300 = vperm.xlu0 %299, %v290
      %v301 = vpop.permute.xlu0 %300
      %304 = vset.pattern.permute.xlu0 0
      %305 = vperm.xlu0 %304, %v291
      %v306 = vpop.permute.xlu0 %305
      %309 = vset.pattern.permute.xlu0 0
      %310 = vperm.xlu0 %309, %v292
      %v311 = vpop.permute.xlu0 %310
      %vm313 = vcmask 556032
      %v315 = vsel %vm313, %v257, 0
      %v318 = vsel %vm313, %v259, 0
      %v321 = vsel %vm313, %v261, 0
      %v324 = vsel %vm313, %v263, 0
      %vm326 = vcmask 1043456
      %v328 = vsel %vm326, %v288, 0
      %330 = vmatprep.subr.mxu0 0.0
      %331 = vmatpush1.msra.mxu0 %v264
      %332 = vmatprep.subr.mxu0 0.0
      %333 = vmatpush1.msra.mxu0 %v265
      %334 = vmatprep.subr.mxu0 0.0
      %335 = vmatpush1.msra.mxu0 %v266
      %336 = vmatprep.subr.mxu0 0.0
      %337 = vmatpush1.msra.mxu0 %v267
      %338 = vmatprep.subr.mxu0 0.0
      %339 = vmatpush1.msra.mxu0 %v268
      %340 = vmatprep.subr.mxu0 0.0
      %341 = vmatpush1.msra.mxu0 %v269
      %342 = vmatprep.subr.mxu0 0.0
      %343 = vmatpush1.msra.mxu0 %v270
      %344 = vmatprep.subr.mxu0 0.0
      %345 = vmatpush1.msra.mxu0 %v271
      %346 = vmatprep.subr.mxu0 0.0
      %347 = vmatpush1.msra.mxu0 %v272
      %348 = vmatprep.subr.mxu0 0.0
      %349 = vmatpush1.msra.mxu0 %v273
      %350 = vmatprep.subr.mxu0 0.0
      %351 = vmatpush1.msra.mxu0 %v274
      %352 = vmatprep.subr.mxu0 0.0
      %353 = vmatpush1.msra.mxu0 %v275
      %354 = vmatprep.subr.mxu0 0.0
      %355 = vmatpush1.msra.mxu0 %v276
      %356 = vmatprep.subr.mxu0 0.0
      %357 = vmatpush1.msra.mxu0 %v277
      %358 = vmatprep.subr.mxu0 0.0
      %359 = vmatpush1.msra.mxu0 %v278
      %360 = vmatprep.subr.mxu0 0.0
      %361 = vmatpush1.msra.mxu0 %v279
      %362 = vmatprep.subr.mxu0 0.0
      %363 = vmatpush1.msra.mxu0 %v280
      %364 = vmatprep.subr.mxu0 0.0
      %365 = vmatpush1.msra.mxu0 %v281
      %366 = vmatprep.subr.mxu0 0.0
      %367 = vmatpush1.msra.mxu0 %v282
      %368 = vmatprep.subr.mxu0 0.0
      %369 = vmatpush1.msra.mxu0 %v283
      %370 = vmatprep.subr.mxu0 0.0
      %371 = vmatpush1.msra.mxu0 %v284
      %372 = vmatprep.subr.mxu0 0.0
      %373 = vmatpush1.msra.mxu0 %v285
      %374 = vmatprep.subr.mxu0 0.0
      %375 = vmatpush1.msra.mxu0 %v286
      %376 = vmatprep.subr.mxu0 0.0
      %377 = vmatpush1.msra.mxu0 %v287
      %378 = vmatprep.subr.mxu0 0.0
      %379 = vmatpush1.msra.mxu0 %v328
      %380 = vmatprep.subr.mxu0 0.0
      %381 = vmatpush1.msra.mxu0 0.0
      %382 = vmatprep.subr.mxu0 0.0
      %383 = vmatpush1.msra.mxu0 0.0
      %384 = vmatprep.subr.mxu0 0.0
      %385 = vmatpush1.msra.mxu0 0.0
      %386 = vmatprep.subr.mxu0 0.0
      %387 = vmatpush1.msra.mxu0 0.0
      %388 = vmatprep.subr.mxu0 0.0
      %389 = vmatpush1.msra.mxu0 0.0
      %390 = vmatprep.subr.mxu0 0.0
      %391 = vmatpush1.msra.mxu0 0.0
      %392 = vmatprep.subr.mxu0 0.0
      %393 = vmatpush1.msra.mxu0 0.0
      %394 = vmatprep.mubr.f32.mxu0 %v315
      %395 = vmatmul.mubr.f32.gmra.mrb[0].mxu0 %v256
      %v396 = vpop.f32.mrb[0].mxu0
      %v397 = vadd.f32 %v296, %v396
      %v398 = vpop.f32.mrb[0].mxu0
      %399 = vmatprep.mubr.f32.mxu0 %v318
      %400 = vmatmul.mubr.f32.gmra.mrb[0].mxu0 %v258
      %v401 = vpop.f32.mrb[0].mxu0
      %v402 = vadd.f32 %v301, %v401
      %v403 = vpop.f32.mrb[0].mxu0
      %404 = vmatprep.mubr.f32.mxu0 %v321
      %405 = vmatmul.mubr.f32.gmra.mrb[0].mxu0 %v260
      %v406 = vpop.f32.mrb[0].mxu0
      %v407 = vadd.f32 %v306, %v406
      %v408 = vpop.f32.mrb[0].mxu0
      %409 = vmatprep.mubr.f32.mxu0 %v324
      %410 = vmatmul.mubr.f32.gmra.mrb[0].mxu0 %v262
      %v411 = vpop.f32.mrb[0].mxu0
      %v412 = vadd.f32 %v311, %v411
      %v413 = vpop.f32.mrb[0].mxu0
      %414 = vdwg.mxu0
      %vm415 = vcmask 130048
      %v416 = vsel %vm415, %v397, 0.0
      %v417 = vsel %vm415, %v402, 0.0
      %v418 = vadd.f32 %v416, %v417
      %v419 = vsel %vm415, %v407, 0.0
      %v420 = vadd.f32 %v418, %v419
      %v421 = vsel %vm415, %v412, 0.0
      %v422 = vadd.f32 %v420, %v421
      %v423 = vrot.slane %v422, 4
      %v424 = vadd.f32 %v422, %v423
      %v425 = vrot.slane %v424, 2
      %v426 = vadd.f32 %v424, %v425
      %v427 = vrot.slane %v426, 1
      %v428 = vadd.f32 %v426, %v427
      %v429 = vrcp.pop 32.0
      %v430 = vmul.f32 %v428, %v429
      %v431 = vsub.f32 %v397, %v430
      %v432 = vsub.f32 %v402, %v430
      %v433 = vsub.f32 %v407, %v430
      %v434 = vsub.f32 %v412, %v430
      %v435 = vmul.f32 %v431, %v431
      %v436 = vmul.f32 %v432, %v432
      %v437 = vmul.f32 %v433, %v433
      %v438 = vmul.f32 %v434, %v434
      %v439 = vsel %vm415, %v435, 0.0
      %v440 = vsel %vm415, %v436, 0.0
      %v441 = vadd.f32 %v439, %v440
      %v442 = vsel %vm415, %v437, 0.0
      %v443 = vadd.f32 %v441, %v442
      %v444 = vsel %vm415, %v438, 0.0
      %v445 = vadd.f32 %v443, %v444
      %v446 = vrot.slane %v445, 4
      %v447 = vadd.f32 %v445, %v446
      %v448 = vrot.slane %v447, 2
      %v449 = vadd.f32 %v447, %v448
      %v450 = vrot.slane %v449, 1
      %v451 = vadd.f32 %v449, %v450
      %v452 = vmul.f32 %v451, %v429
      %v453 = vadd.f32 %v452, 1e-06
      %v454 = vrsqrt.pop %v453
      %v455 = vmul.f32 %v431, %v454
      %v456 = vmul.f32 %v432, %v454
      %v457 = vmul.f32 %v433, %v454
      %v458 = vmul.f32 %v434, %v454
      %v459 = vld [vmem:[%s3] sm:$0xff]
      %v460 = vld [vmem:[%s3 + $0x8] sm:$0xff]
      %v461 = vld [vmem:[%s3 + $0x10] sm:$0xff]
      %v462 = vld [vmem:[%s3 + $0x18] sm:$0xff]
      %464 = vset.pattern.permute.xlu0 0
      %465 = vperm.xlu0 %464, %v459
      %v466 = vpop.permute.xlu0 %465
      %469 = vset.pattern.permute.xlu0 0
      %470 = vperm.xlu0 %469, %v460
      %v471 = vpop.permute.xlu0 %470
      %474 = vset.pattern.permute.xlu0 0
      %475 = vperm.xlu0 %474, %v461
      %v476 = vpop.permute.xlu0 %475
      %479 = vset.pattern.permute.xlu0 0
      %480 = vperm.xlu0 %479, %v462
      %v481 = vpop.permute.xlu0 %480
      %v483 = vmul.f32 %v455, %v466
      %v484 = vmul.f32 %v456, %v471
      %v485 = vmul.f32 %v457, %v476
      %v486 = vmul.f32 %v458, %v481
      %v487 = vld [vmem:[%s4] sm:$0xff]
      %v488 = vld [vmem:[%s4 + $0x8] sm:$0xff]
      %v489 = vld [vmem:[%s4 + $0x10] sm:$0xff]
      %v490 = vld [vmem:[%s4 + $0x18] sm:$0xff]
      %492 = vset.pattern.permute.xlu0 0
      %493 = vperm.xlu0 %492, %v487
      %v494 = vpop.permute.xlu0 %493
      %497 = vset.pattern.permute.xlu0 0
      %498 = vperm.xlu0 %497, %v488
      %v499 = vpop.permute.xlu0 %498
      %502 = vset.pattern.permute.xlu0 0
      %503 = vperm.xlu0 %502, %v489
      %v504 = vpop.permute.xlu0 %503
      %507 = vset.pattern.permute.xlu0 0
      %508 = vperm.xlu0 %507, %v490
      %v509 = vpop.permute.xlu0 %508
      %v511 = vadd.f32 %v483, %v494
      %v512 = vadd.f32 %v484, %v499
      %v513 = vadd.f32 %v485, %v504
      %v514 = vadd.f32 %v486, %v509
      %515 = vst.msk [vmem:[%s255] sm:$0xff] %vm415, %v511
      %516 = vst.msk [vmem:[%s255 + $0x8] sm:$0xff] %vm415, %v512
      %517 = vst.msk [vmem:[%s255 + $0x10] sm:$0xff] %vm415, %v513
      %518 = vst.msk [vmem:[%s255 + $0x18] sm:$0xff] %vm415, %v514
      %p519 = scmp.lt.s32.totalorder %s20, 1
      %s520 = scalar_select %p519, %s20, 1
      %p521 = scmp.lt.s32.totalorder %s21, 0
      %s522 = scalar_select %p521, %s21, 0
      %s523 = smul.addr %s520, 4
      %s524 = sadd.s32 %s522, %s523
      %s525 = smul.addr %s524, 8
      %s526 = scalar_lea.vmem %s5, %s525
      // Predicated region
      $region41: #{tpu_custom_call.1} parent=39 // pred_check
        %p527 = pneg %p160
      $region42: #{tpu_custom_call.1} parent=39 // pred_check_branch
        %529 = sbr.rel (%p527) target = $region44
      $region43: #{tpu_custom_call.1} parent=39 // pred_region
        _
      $region44: #{tpu_custom_call.1} parent=39 // pred_fallthru
        _
    $region40: #{tpu_custom_call.1} parent=5 // pred_fallthru
      _
    %p530 = scmp.le.s32.totalorder 2, %s11
    // Predicated region
    $region45: #{tpu_custom_call.1} parent=5 // pred_check
      %p531 = pneg %p530
    $region46: #{tpu_custom_call.1} parent=5 // pred_check_branch
      %533 = sbr.rel (%p531) target = $region48
    $region47: #{tpu_custom_call.1} parent=5 // pred_region
      %s534 = ssub.s32 %s11, 2
      // Predicated region
      $region49: #{tpu_custom_call.1} parent=47 // pred_check
        %p535 = pneg %p166
      $region50: #{tpu_custom_call.1} parent=47 // pred_check_branch
        %537 = sbr.rel (%p535) target = $region52
      $region51: #{tpu_custom_call.1} parent=47 // pred_region
        %p538 = scmp.lt.s32.totalorder %s22, 1
        %s539 = scalar_select %p538, %s22, 1
        %p540 = scmp.lt.s32.totalorder %s23, 0
        %s541 = scalar_select %p540, %s23, 0
        %s542 = smul.addr %s539, 4
        %s543 = sadd.s32 %s541, %s542
        %s544 = smul.addr %s543, 8
        %s545 = scalar_lea.vmem %s5, %s544
      $region52: #{tpu_custom_call.1} parent=47 // pred_fallthru
        _
    $region48: #{tpu_custom_call.1} parent=5 // pred_fallthru
      _
  $region6: #{tpu_custom_call.1} parent=0 // loop_footer
    %s15 = sadd.s32 1, %s11
  $region7: #{tpu_custom_call.1} parent=0 // loop_footer_branch
    %10 = sbr.rel target = $region3
  $region8: #{tpu_custom_call.1} parent=0 // loop_exit
    _

</llo_original>
